<compile_context>
chip_gen: v7x
topology: tpu7x:2x2x1
jax: 0.10.0
libtpu: 0.0.40
codegen_flags: <defaults>
</compile_context>

<pallas_src>
import functools

import jax
import jax.numpy as jnp
from jax import lax
from jax.experimental import pallas as pl
from jax.experimental.pallas import tpu as pltpu

_LANE = 128


def _round_up(v, m):
    return ((v + m - 1) // m) * m


def _seq_attn_kernel(x_ref, y_ref, w_ref, b_ref, o_ref, *, l2_valid):
    bt, l1, hp = x_ref.shape
    _, l2p, _ = y_ref.shape

    w = w_ref[...]                              # (Hp, Hp), PyTorch (out, in)
    b = b_ref[...].astype(jnp.float32)          # (1, Hp)

    # Shared projection: two "NT" matmuls against the same resident weight
    # (no concat / slice VMEM copies), f32 accumulation on the MXU, then
    # bias + ReLU on the VPU.
    x2 = x_ref[...].reshape(bt * l1, hp)
    y2 = y_ref[...].reshape(bt * l2p, hp)
    xp = lax.dot_general(x2, w, dimension_numbers=(((1,), (1,)), ((), ())),
                         preferred_element_type=jnp.float32)
    yp = lax.dot_general(y2, w, dimension_numbers=(((1,), (1,)), ((), ())),
                         preferred_element_type=jnp.float32)
    x_proj = jnp.maximum(xp + b, 0.0).reshape(bt, l1, hp).astype(x_ref.dtype)
    y_proj = jnp.maximum(yp + b, 0.0).reshape(bt, l2p, hp).astype(y_ref.dtype)

    # Attention scores (Bt, L1, L2p), f32 accumulation on the MXU.
    scores = jnp.einsum("bqh,bkh->bqk", x_proj, y_proj,
                        preferred_element_type=jnp.float32)

    # Padded key columns are NOT numerically inert (bias + ReLU makes the
    # padded y_proj rows nonzero) -> push them to -inf before the softmax.
    if l2_valid < l2p:
        key_idx = lax.broadcasted_iota(jnp.int32, (1, 1, l2p), 2)
        scores = jnp.where(key_idx < l2_valid, scores, -1e30)

    # Global (per-batch) softmax statistics over all L1*L2 scores: row-wise
    # XLU reduce over the lane axis, then a tiny reduce over the column.
    row_max = jnp.max(scores, axis=-1, keepdims=True)        # (Bt, L1, 1)
    m = jnp.max(row_max, axis=-2, keepdims=True)             # (Bt, 1, 1)
    e = jnp.exp(scores - m)                                   # EUP
    row_sum = jnp.sum(e, axis=-1, keepdims=True)              # (Bt, L1, 1)
    denom = jnp.sum(row_sum, axis=-2, keepdims=True)          # (Bt, 1, 1)

    # Deferred normalization: unnormalized weighted sum of y on the MXU
    # (e <= 1 after subtracting the global max, so the cast to the input
    # dtype is safe for bf16), then EXACT division on the small f32
    # (Bt, L1, Hp) accumulator.
    ey = jnp.einsum("bqk,bkh->bqh", e.astype(y_ref.dtype), y_ref[...],
                    preferred_element_type=jnp.float32)
    o_ref[...] = (ey / denom).astype(o_ref.dtype)


def _tpu_caps():
    """(vmem_capacity_bytes, has_two_tensorcores) with safe fallbacks."""
    vmem_cap = 128 * 1024 * 1024
    try:
        info = pltpu.get_tpu_info()
        vmem_cap = int(getattr(info, "vmem_capacity_bytes", vmem_cap))
    except Exception:
        pass
    kind = ""
    try:
        kind = jax.devices()[0].device_kind.lower()
    except Exception:
        pass
    two_tc = ("v7" in kind) or ("7x" in kind) or (vmem_cap <= 64 * 1024 * 1024)
    return vmem_cap, two_tc


def _vmem_need_bytes(bt, l1, l2p, hp, x_isz, w_isz):
    # The auto-pipeline double-buffers every BlockSpec operand (including the
    # constant weight/bias blocks -- see the Buffered(1) TODO above).
    blocks = 2 * (bt * l1 * hp + bt * l2p * hp + bt * l1 * hp) * x_isz
    blocks += 2 * (hp * hp * w_isz + hp * 4)
    interm = 4 * (bt * (l1 + l2p) * hp        # f32 projections
                  + 2 * bt * l1 * l2p         # scores + e
                  + bt * l1 * hp)             # f32 output accumulator
    return blocks + interm


def _pick_batch_tile(b, fits, prefer_two_steps):
    divisors = [d for d in range(b, 0, -1) if b % d == 0]
    if prefer_two_steps and b >= 2:
        # Keep both v7x TensorCores busy via "parallel" grid sharding.
        for d in divisors:
            if b // d >= 2 and fits(d):
                return d
    # Single-TC parts (v5e/v6e): take the largest tile that fits -- extra
    # grid steps only add ~0.35us/step overhead and halve MXU row fill.
    for d in divisors:
        if fits(d):
            return d
    # TODO(synk): online-softmax L2 tiling once even Bt=1 overflows VMEM.
    return 1


def seq_attn_match_glb_norm(x, y, weight, bias):
    """x: (B, L1, H), y: (B, L2, H), weight: (H, H) PyTorch (out, in), bias: (H,)."""
    B, L1, H = x.shape
    _, L2, _ = y.shape

    # Pad the hidden dim to a lane-dense multiple of 128.  Numerically inert:
    # padded weight rows/cols and bias entries are zero, so the extra
    # projection columns are relu(0) = 0 and contribute nothing to scores;
    # padded output columns are sliced off below.
    Hp = _round_up(H, _LANE)
    # Pad L2 to a lane-dense multiple of 128 so the scores / e tiles are full
    # vregs; the padded key columns are masked to -inf inside the kernel.
    L2p = _round_up(L2, _LANE)
    if Hp != H:
        ph = Hp - H
        x = jnp.pad(x, ((0, 0), (0, 0), (0, ph)))
        y = jnp.pad(y, ((0, 0), (0, 0), (0, ph)))
        weight = jnp.pad(weight, ((0, ph), (0, ph)))
        bias = jnp.pad(bias, ((0, ph),))
    if L2p != L2:
        y = jnp.pad(y, ((0, 0), (0, L2p - L2), (0, 0)))
    b2 = bias.reshape(1, Hp)

    vmem_cap, two_tc = _tpu_caps()
    budget = min(vmem_cap * 3 // 4, 100 * 1024 * 1024)
    x_isz = jnp.dtype(x.dtype).itemsize
    w_isz = jnp.dtype(weight.dtype).itemsize
    b_isz = jnp.dtype(bias.dtype).itemsize

    def fits(bt):
        return _vmem_need_bytes(bt, L1, L2p, Hp, x_isz, w_isz) * 5 // 4 <= budget

    Bt = _pick_batch_tile(B, fits, prefer_two_steps=two_tc)
    grid = (B // Bt,)

    need = _vmem_need_bytes(Bt, L1, L2p, Hp, x_isz, w_isz)
    vmem_limit = int(min(budget, max(need + need // 2, 32 * 1024 * 1024)))

    flops = (2 * B * (L1 + L2p) * Hp * Hp          # shared projection
             + 2 * B * L1 * L2p * Hp               # scores
             + 2 * B * L1 * L2p * Hp)              # e @ y
    bytes_accessed = (x.size * x_isz + y.size * x_isz
                      + weight.size * w_isz + bias.size * b_isz
                      + B * L1 * Hp * x_isz)
    cost = pl.CostEstimate(flops=int(flops),
                           transcendentals=int(B * L1 * L2p),
                           bytes_accessed=int(bytes_accessed))

    kernel = functools.partial(_seq_attn_kernel, l2_valid=L2)

    out = pl.pallas_call(
        kernel,
        out_shape=jax.ShapeDtypeStruct((B, L1, Hp), x.dtype),
        grid_spec=pltpu.PrefetchScalarGridSpec(
            num_scalar_prefetch=0,
            grid=grid,
            in_specs=[
                pl.BlockSpec((Bt, L1, Hp), lambda i: (i, 0, 0)),
                pl.BlockSpec((Bt, L2p, Hp), lambda i: (i, 0, 0)),
                pl.BlockSpec((Hp, Hp), lambda i: (0, 0)),
                pl.BlockSpec((1, Hp), lambda i: (0, 0)),
            ],
            out_specs=pl.BlockSpec((Bt, L1, Hp), lambda i: (i, 0, 0)),
        ),
        compiler_params=pltpu.CompilerParams(
            dimension_semantics=("parallel",),
            vmem_limit_bytes=vmem_limit),
        cost_estimate=cost,
    )(x, y, weight, b2)

    if Hp != H:
        out = out[..., :H]
    return out


def _reference(x, y, weight, bias):
    # Pure-JAX reference mirroring the PyTorch forward.
    x_proj = jax.nn.relu(jnp.einsum("blh,oh->blo", x, weight) + bias)
    y_proj = jax.nn.relu(jnp.einsum("blh,oh->blo", y, weight) + bias)
    scores = jnp.einsum("bqh,bkh->bqk", x_proj, y_proj)
    B, L1, L2 = scores.shape
    alpha = jax.nn.softmax(scores.reshape(B, -1), axis=-1).reshape(B, L1, L2)
    return jnp.einsum("bqk,bkh->bqh", alpha, y)


if __name__ == "__main__":
    B, L1, L2, H = 2, 8, 8, 32
    key = jax.random.PRNGKey(0)
    kx, ky, kw, kb = jax.random.split(key, 4)

    x = jax.random.normal(kx, (B, L1, H), dtype=jnp.float32)
    y = jax.random.normal(ky, (B, L2, H), dtype=jnp.float32)
    # PyTorch nn.Linear(H, H) parameter shapes: weight (out, in), bias (out,).
    weight = jax.random.normal(kw, (H, H), dtype=jnp.float32) * (1.0 / jnp.sqrt(H))
    bias = jax.random.normal(kb, (H,), dtype=jnp.float32) * 0.01

    out = seq_attn_match_glb_norm(x, y, weight, bias)
    out = jax.block_until_ready(out)

    ref = _reference(x, y, weight, bias)
    # Tolerance covers f32-on-MXU accumulation-order differences vs. the
    # XLA reference (the approx reciprocal is gone).
    assert jnp.allclose(out, ref, atol=2e-3, rtol=2e-3), "mismatch vs reference"

    print("KERNEL_OK")
</pallas_src>

<mosaic_0001>
module attributes {stable_mosaic.version = 11 : i64} {
  func.func @_seq_attn_kernel(%arg0: i32, %arg1: memref<2x8x128xf32, #tpu.memory_space<vmem>>, %arg2: memref<2x128x128xf32, #tpu.memory_space<vmem>>, %arg3: memref<128x128xf32, #tpu.memory_space<vmem>>, %arg4: memref<1x128xf32, #tpu.memory_space<vmem>>, %arg5: memref<2x8x128xf32, #tpu.memory_space<vmem>>) attributes {dimension_semantics = [#tpu.dimension_semantics<parallel>], iteration_bounds = array<i64: 1>, scalar_prefetch = 0 : i64, scratch_operands = 0 : i64, tpu.core_type = #tpu.core_type<tc>, window_params = [{transform_indices = @transform_0, window_bounds = array<i64: 2, 8, 128>}, {transform_indices = @transform_1, window_bounds = array<i64: 2, 128, 128>}, {pipeline_mode = #tpu.pipeline_mode<synchronous>, transform_indices = @transform_2, window_bounds = array<i64: 128, 128>}, {pipeline_mode = #tpu.pipeline_mode<synchronous>, transform_indices = @transform_3, window_bounds = array<i64: 1, 128>}, {transform_indices = @transform_4, window_bounds = array<i64: 2, 8, 128>}]} {
    %c0 = arith.constant 0 : index
    %c0_0 = arith.constant 0 : index
    %0 = vector.load %arg3[%c0, %c0_0] : memref<128x128xf32, #tpu.memory_space<vmem>>, vector<128x128xf32>
    %c0_1 = arith.constant 0 : index
    %c0_2 = arith.constant 0 : index
    %1 = vector.load %arg4[%c0_1, %c0_2] : memref<1x128xf32, #tpu.memory_space<vmem>>, vector<1x128xf32>
    %c0_3 = arith.constant 0 : index
    %c0_4 = arith.constant 0 : index
    %c0_5 = arith.constant 0 : index
    %2 = vector.load %arg1[%c0_3, %c0_4, %c0_5] : memref<2x8x128xf32, #tpu.memory_space<vmem>>, vector<2x8x128xf32>
    %3 = vector.shape_cast %2 : vector<2x8x128xf32> to vector<16x128xf32>
    %c0_6 = arith.constant 0 : index
    %c0_7 = arith.constant 0 : index
    %c0_8 = arith.constant 0 : index
    %4 = vector.load %arg2[%c0_6, %c0_7, %c0_8] : memref<2x128x128xf32, #tpu.memory_space<vmem>>, vector<2x128x128xf32>
    %5 = vector.shape_cast %4 : vector<2x128x128xf32> to vector<256x128xf32>
    %cst = arith.constant dense<0.000000e+00> : vector<16x128xf32>
    %6 = tpu.matmul %3, %0, %cst {dimension_numbers = #tpu.dot_dimension_numbers<[1], [1], [0], [0], [0, 0, 1, 0], [], []>} : vector<16x128xf32>, vector<128x128xf32>, vector<16x128xf32> -> vector<16x128xf32>
    %cst_9 = arith.constant dense<0.000000e+00> : vector<256x128xf32>
    %7 = tpu.matmul %5, %0, %cst_9 {dimension_numbers = #tpu.dot_dimension_numbers<[1], [1], [0], [0], [0, 0, 1, 0], [], []>} : vector<256x128xf32>, vector<128x128xf32>, vector<256x128xf32> -> vector<256x128xf32>
    %8 = vector.broadcast %1 : vector<1x128xf32> to vector<16x128xf32>
    %9 = arith.addf %6, %8 : vector<16x128xf32>
    %cst_10 = arith.constant 0.000000e+00 : f32
    %10 = vector.broadcast %cst_10 : f32 to vector<16x128xf32>
    %11 = arith.maximumf %9, %10 : vector<16x128xf32>
    %12 = vector.shape_cast %11 : vector<16x128xf32> to vector<2x8x128xf32>
    %13 = vector.broadcast %1 : vector<1x128xf32> to vector<256x128xf32>
    %14 = arith.addf %7, %13 : vector<256x128xf32>
    %cst_11 = arith.constant 0.000000e+00 : f32
    %15 = vector.broadcast %cst_11 : f32 to vector<256x128xf32>
    %16 = arith.maximumf %14, %15 : vector<256x128xf32>
    %17 = vector.shape_cast %16 : vector<256x128xf32> to vector<2x128x128xf32>
    "tpu.trace_start"() <{level = 10 : i32, message = "bqh,bkh->bqk"}> : () -> ()
    %cst_12 = arith.constant dense<0.000000e+00> : vector<2x8x128xf32>
    %18 = tpu.matmul %12, %17, %cst_12 {dimension_numbers = #tpu.dot_dimension_numbers<[2], [2], [1], [1], [0, 0, 0, 1, 1, 1], [0], [0]>} : vector<2x8x128xf32>, vector<2x128x128xf32>, vector<2x8x128xf32> -> vector<2x8x128xf32>
    "tpu.trace_stop"() : () -> ()
    %19 = tpu.iota {dimensions = array<i32: 2>} : vector<1x1x128xi32>
    %c8_i32 = arith.constant 8 : i32
    %20 = vector.broadcast %c8_i32 : i32 to vector<1x1x128xi32>
    %21 = arith.cmpi slt, %19, %20 : vector<1x1x128xi32>
    %cst_13 = arith.constant -1.000000e+30 : f32
    %22 = vector.shape_cast %21 : vector<1x1x128xi1> to vector<1x1x128xi1>
    %23 = vector.broadcast %22 : vector<1x1x128xi1> to vector<2x8x128xi1>
    %24 = vector.broadcast %cst_13 : f32 to vector<2x8x128xf32>
    %25 = arith.select %23, %18, %24 : vector<2x8x128xi1>, vector<2x8x128xf32>
    %cst_14 = arith.constant dense<0xFF800000> : vector<2x8xf32>
    %26 = vector.multi_reduction <maximumf>, %25, %cst_14 [2] : vector<2x8x128xf32> to vector<2x8xf32>
    %27 = vector.shape_cast %26 : vector<2x8xf32> to vector<2x8x1xf32>
    %cst_15 = arith.constant dense<0xFF800000> : vector<2x1xf32>
    %28 = vector.multi_reduction <maximumf>, %27, %cst_15 [1] : vector<2x8x1xf32> to vector<2x1xf32>
    %29 = vector.shape_cast %28 : vector<2x1xf32> to vector<2x1x1xf32>
    %30 = vector.broadcast %29 : vector<2x1x1xf32> to vector<2x8x128xf32>
    %31 = arith.subf %25, %30 : vector<2x8x128xf32>
    %32 = math.exp %31 : vector<2x8x128xf32>
    %cst_16 = arith.constant dense<0.000000e+00> : vector<2x8xf32>
    %33 = vector.multi_reduction <add>, %32, %cst_16 [2] : vector<2x8x128xf32> to vector<2x8xf32>
    %34 = vector.shape_cast %33 : vector<2x8xf32> to vector<2x8x1xf32>
    %cst_17 = arith.constant dense<0.000000e+00> : vector<2x1xf32>
    %35 = vector.multi_reduction <add>, %34, %cst_17 [1] : vector<2x8x1xf32> to vector<2x1xf32>
    %36 = vector.shape_cast %35 : vector<2x1xf32> to vector<2x1x1xf32>
    %c0_18 = arith.constant 0 : index
    %c0_19 = arith.constant 0 : index
    %c0_20 = arith.constant 0 : index
    %37 = vector.load %arg2[%c0_18, %c0_19, %c0_20] : memref<2x128x128xf32, #tpu.memory_space<vmem>>, vector<2x128x128xf32>
    "tpu.trace_start"() <{level = 10 : i32, message = "bqk,bkh->bqh"}> : () -> ()
    %cst_21 = arith.constant dense<0.000000e+00> : vector<2x8x128xf32>
    %38 = tpu.matmul %32, %37, %cst_21 {dimension_numbers = #tpu.dot_dimension_numbers<[2], [1], [1], [2], [0, 0, 0, 1, 1, 2], [0], [0]>} : vector<2x8x128xf32>, vector<2x128x128xf32>, vector<2x8x128xf32> -> vector<2x8x128xf32>
    "tpu.trace_stop"() : () -> ()
    %39 = vector.broadcast %36 : vector<2x1x1xf32> to vector<2x8x128xf32>
    %40 = arith.divf %38, %39 : vector<2x8x128xf32>
    %c0_22 = arith.constant 0 : index
    %c0_23 = arith.constant 0 : index
    %c0_24 = arith.constant 0 : index
    %41 = vector.load %arg5[%c0_22, %c0_23, %c0_24] : memref<2x8x128xf32, #tpu.memory_space<vmem>>, vector<2x8x128xf32>
    tpu.vector_store %arg5[%c0_22, %c0_23, %c0_24], %40 {strides = array<i32>} : memref<2x8x128xf32, #tpu.memory_space<vmem>>, vector<2x8x128xf32>,
    return
  }
  func.func @transform_0(%arg0: i32) -> (i32, i32, i32) {
    %c0_i32 = arith.constant 0 : i32
    %c0_i32_0 = arith.constant 0 : i32
    %c0_i32_1 = arith.constant 0 : i32
    return %arg0, %c0_i32, %c0_i32_0 : i32, i32, i32
  }
  func.func @transform_1(%arg0: i32) -> (i32, i32, i32) {
    %c0_i32 = arith.constant 0 : i32
    %c0_i32_0 = arith.constant 0 : i32
    %c0_i32_1 = arith.constant 0 : i32
    return %arg0, %c0_i32, %c0_i32_0 : i32, i32, i32
  }
  func.func @transform_2(%arg0: i32) -> (i32, i32) {
    %c0_i32 = arith.constant 0 : i32
    %c0_i32_0 = arith.constant 0 : i32
    %c0_i32_1 = arith.constant 0 : i32
    return %c0_i32, %c0_i32_0 : i32, i32
  }
  func.func @transform_3(%arg0: i32) -> (i32, i32) {
    %c0_i32 = arith.constant 0 : i32
    %c0_i32_0 = arith.constant 0 : i32
    %c0_i32_1 = arith.constant 0 : i32
    return %c0_i32, %c0_i32_0 : i32, i32
  }
  func.func @transform_4(%arg0: i32) -> (i32, i32, i32) {
    %c0_i32 = arith.constant 0 : i32
    %c0_i32_0 = arith.constant 0 : i32
    %c0_i32_1 = arith.constant 0 : i32
    return %arg0, %c0_i32, %c0_i32_0 : i32, i32, i32
  }
}

</mosaic_0001>

<llo_original>
// kernel: tpu_custom_call.1
$region0: #{tpu_custom_call.1}
  #allocation0 [shape = 'u32[]', space=smem, size = 0x4, offset = 0x4, fixed_abs, tag = 'smem constant byte address 0x4 - core index']
  #allocation1 [shape = 'u32[144,128]{1,0:T(1,128)}', space=vmem, size = 0x12000, scoped, tag = 'internal scratch']
  %s0 = inlined_call_operand.hbm [shape: f32[2,8,128], index: 0, kind: input, shape index: {}]
  %s1 = inlined_call_operand.hbm [shape: f32[2,128,128], index: 1, kind: input, shape index: {}]
  %s2 = inlined_call_operand.hbm [shape: f32[128,128], index: 2, kind: input, shape index: {}]
  %s3 = inlined_call_operand.vmem [shape: f32[1,128], index: 3, kind: input, shape index: {}]
  %s4 = inlined_call_operand.hbm [shape: f32[2,8,128], index: 4, kind: output, shape index: {}]
  %s5 = sld [smem:[#allocation0]]
  $region38: #{tpu_custom_call.1} parent=0
    _
  %s7 = ssub.s32 1, %s5
  %s8 = scalar_select 0, %s7, %s5
  $region1: #{tpu_custom_call.1} parent=0
    #allocation2 [shape = 'u8[8192]{0}', space=vmem, size = 0x2000, scoped, tag = 'input window, operand 0, single buffered']
    #allocation3 [shape = 's32[1]{0}', space=sflag, size = 0x4, scoped, tag = 'scoped memory for tpu_custom_call.1']
    #allocation4 [shape = 's32[1]{0}', space=sflag, size = 0x4, scoped, tag = 'scoped memory for tpu_custom_call.1']
    #allocation5 [shape = 'u8[131072]{0}', space=vmem, size = 0x20000, scoped, tag = 'input window, operand 1, single buffered']
    #allocation6 [shape = 's32[1]{0}', space=sflag, size = 0x4, scoped, tag = 'scoped memory for tpu_custom_call.1']
    #allocation7 [shape = 'u8[65536]{0}', space=vmem, size = 0x10000, scoped, tag = 'input window, operand 2, single buffered']
    #allocation8 [shape = 'u8[8192]{0}', space=vmem, size = 0x2000, scoped, tag = 'output window, operand 0, single buffered']
    %9 = vsyncpa [#allocation3], 0
    %10 = vsyncpa [#allocation6], 0
    %11 = vsyncpa [#allocation4], 0
    // Predicated region
    $region2: #{tpu_custom_call.1} parent=1 // pred_check
      _
    $region3: #{tpu_custom_call.1} parent=1 // pred_check_branch
      %13 = sbr.rel (0) target = $region5
    $region4: #{tpu_custom_call.1} parent=1 // pred_region
      %s15 = ssub.s32 256, 256
      %16 = vsyncadd [#allocation3], %s15
      %s17 = sshll.u32 [#allocation2], 4
      %s18 = int_to_ptr.vmem [resolvable:$true] %s17
      %23 = dma.hbm_to_vmem [thread:$0]  %s0, 256, %s18, [#allocation3], 128, 128, 8
    $region5: #{tpu_custom_call.1} parent=1 // pred_fallthru
      _
    // Predicated region
    $region6: #{tpu_custom_call.1} parent=1 // pred_check
      _
    $region7: #{tpu_custom_call.1} parent=1 // pred_check_branch
      %25 = sbr.rel (0) target = $region9
    $region8: #{tpu_custom_call.1} parent=1 // pred_region
      %s27 = ssub.s32 4096, 4096
      %28 = vsyncadd [#allocation6], %s27
      %s29 = sshll.u32 [#allocation5], 4
      %s30 = int_to_ptr.vmem [resolvable:$true] %s29
      %35 = dma.hbm_to_vmem [thread:$0]  %s1, 4096, %s30, [#allocation6], 128, 128, 8
    $region9: #{tpu_custom_call.1} parent=1 // pred_fallthru
      _
    // Predicated region
    $region10: #{tpu_custom_call.1} parent=1 // pred_check
      _
    $region11: #{tpu_custom_call.1} parent=1 // pred_check_branch
      %37 = sbr.rel (0) target = $region13
    $region12: #{tpu_custom_call.1} parent=1 // pred_region
      %s39 = ssub.s32 2048, 2048
      %40 = vsyncadd [#allocation6], %s39
      %s41 = sshll.u32 [#allocation7], 4
      %s42 = int_to_ptr.vmem [resolvable:$true] %s41
      %47 = dma.hbm_to_vmem [thread:$0]  %s2, 2048, %s42, [#allocation6], 128, 128, 8
    $region13: #{tpu_custom_call.1} parent=1 // pred_fallthru
      _
    // Predicated region
    $region14: #{tpu_custom_call.1} parent=1 // pred_check
      _
    $region15: #{tpu_custom_call.1} parent=1 // pred_check_branch
      %49 = sbr.rel (0) target = $region17
    $region16: #{tpu_custom_call.1} parent=1 // pred_region
      _
    $region17: #{tpu_custom_call.1} parent=1 // pred_fallthru
      _
    // Predicated region
    $region18: #{tpu_custom_call.1} parent=1 // pred_check
      _
    $region19: #{tpu_custom_call.1} parent=1 // pred_check_branch
      %51 = sbr.rel (0) target = $region21
    $region20: #{tpu_custom_call.1} parent=1 // pred_region
      %52 = dma.done [#allocation3], 256
    $region21: #{tpu_custom_call.1} parent=1 // pred_fallthru
      _
    // Predicated region
    $region22: #{tpu_custom_call.1} parent=1 // pred_check
      _
    $region23: #{tpu_custom_call.1} parent=1 // pred_check_branch
      %54 = sbr.rel (0) target = $region25
    $region24: #{tpu_custom_call.1} parent=1 // pred_region
      %55 = dma.done [#allocation6], 4096
    $region25: #{tpu_custom_call.1} parent=1 // pred_fallthru
      _
    // Predicated region
    $region26: #{tpu_custom_call.1} parent=1 // pred_check
      _
    $region27: #{tpu_custom_call.1} parent=1 // pred_check_branch
      %57 = sbr.rel (0) target = $region29
    $region28: #{tpu_custom_call.1} parent=1 // pred_region
      %58 = dma.done [#allocation6], 2048
    $region29: #{tpu_custom_call.1} parent=1 // pred_fallthru
      _
    %v59 = vld [vmem:[#allocation7] sm:$0xff]
    %v60 = vld [vmem:[#allocation7 + $0x8] sm:$0xff]
    %v61 = vld [vmem:[#allocation7 + $0x10] sm:$0xff]
    %v62 = vld [vmem:[#allocation7 + $0x18] sm:$0xff]
    %v63 = vld [vmem:[#allocation7 + $0x20] sm:$0xff]
    %v64 = vld [vmem:[#allocation7 + $0x28] sm:$0xff]
    %v65 = vld [vmem:[#allocation7 + $0x30] sm:$0xff]
    %v66 = vld [vmem:[#allocation7 + $0x38] sm:$0xff]
    %v67 = vld [vmem:[#allocation7 + $0x40] sm:$0xff]
    %v68 = vld [vmem:[#allocation7 + $0x48] sm:$0xff]
    %v69 = vld [vmem:[#allocation7 + $0x50] sm:$0xff]
    %v70 = vld [vmem:[#allocation7 + $0x58] sm:$0xff]
    %v71 = vld [vmem:[#allocation7 + $0x60] sm:$0xff]
    %v72 = vld [vmem:[#allocation7 + $0x68] sm:$0xff]
    %v73 = vld [vmem:[#allocation7 + $0x70] sm:$0xff]
    %v74 = vld [vmem:[#allocation7 + $0x78] sm:$0xff]
    %v75 = vld [vmem:[%s3] sm:$0x1]
    %v76 = vld [vmem:[#allocation2] sm:$0xff]
    %v77 = vld [vmem:[#allocation2 + $0x8] sm:$0xff]
    %v78 = vld [vmem:[#allocation5] sm:$0xff]
    %v79 = vld [vmem:[#allocation5 + $0x8] sm:$0xff]
    %v80 = vld [vmem:[#allocation5 + $0x10] sm:$0xff]
    %v81 = vld [vmem:[#allocation5 + $0x18] sm:$0xff]
    %v82 = vld [vmem:[#allocation5 + $0x20] sm:$0xff]
    %v83 = vld [vmem:[#allocation5 + $0x28] sm:$0xff]
    %v84 = vld [vmem:[#allocation5 + $0x30] sm:$0xff]
    %v85 = vld [vmem:[#allocation5 + $0x38] sm:$0xff]
    %v86 = vld [vmem:[#allocation5 + $0x40] sm:$0xff]
    %v87 = vld [vmem:[#allocation5 + $0x48] sm:$0xff]
    %v88 = vld [vmem:[#allocation5 + $0x50] sm:$0xff]
    %v89 = vld [vmem:[#allocation5 + $0x58] sm:$0xff]
    %v90 = vld [vmem:[#allocation5 + $0x60] sm:$0xff]
    %v91 = vld [vmem:[#allocation5 + $0x68] sm:$0xff]
    %v92 = vld [vmem:[#allocation5 + $0x70] sm:$0xff]
    %v93 = vld [vmem:[#allocation5 + $0x78] sm:$0xff]
    %v94 = vld [vmem:[#allocation5 + $0x80] sm:$0xff]
    %v95 = vld [vmem:[#allocation5 + $0x88] sm:$0xff]
    %v96 = vld [vmem:[#allocation5 + $0x90] sm:$0xff]
    %v97 = vld [vmem:[#allocation5 + $0x98] sm:$0xff]
    %v98 = vld [vmem:[#allocation5 + $0xa0] sm:$0xff]
    %v99 = vld [vmem:[#allocation5 + $0xa8] sm:$0xff]
    %v100 = vld [vmem:[#allocation5 + $0xb0] sm:$0xff]
    %v101 = vld [vmem:[#allocation5 + $0xb8] sm:$0xff]
    %v102 = vld [vmem:[#allocation5 + $0xc0] sm:$0xff]
    %v103 = vld [vmem:[#allocation5 + $0xc8] sm:$0xff]
    %v104 = vld [vmem:[#allocation5 + $0xd0] sm:$0xff]
    %v105 = vld [vmem:[#allocation5 + $0xd8] sm:$0xff]
    %v106 = vld [vmem:[#allocation5 + $0xe0] sm:$0xff]
    %v107 = vld [vmem:[#allocation5 + $0xe8] sm:$0xff]
    %v108 = vld [vmem:[#allocation5 + $0xf0] sm:$0xff]
    %v109 = vld [vmem:[#allocation5 + $0xf8] sm:$0xff]
    %v111 = vlaneseq
    %v112 = vshrl.u32 %v111, 7
    %v113 = vsub.s32 0, %v112
    %v114 = vrot.slane %v75, %v113
    %116 = vmatprep.subr.mxu0 0.0
    %117 = vmatpush1.xpose.msra.mxu0 %v59
    %118 = vmatprep.subr.mxu0 0.0
    %119 = vmatpush1.xpose.msra.mxu0 %v60
    %120 = vmatprep.subr.mxu0 0.0
    %121 = vmatpush1.xpose.msra.mxu0 %v61
    %122 = vmatprep.subr.mxu0 0.0
    %123 = vmatpush1.xpose.msra.mxu0 %v62
    %124 = vmatprep.subr.mxu0 0.0
    %125 = vmatpush1.xpose.msra.mxu0 %v63
    %126 = vmatprep.subr.mxu0 0.0
    %127 = vmatpush1.xpose.msra.mxu0 %v64
    %128 = vmatprep.subr.mxu0 0.0
    %129 = vmatpush1.xpose.msra.mxu0 %v65
    %130 = vmatprep.subr.mxu0 0.0
    %131 = vmatpush1.xpose.msra.mxu0 %v66
    %132 = vmatprep.subr.mxu0 0.0
    %133 = vmatpush1.xpose.msra.mxu0 %v67
    %134 = vmatprep.subr.mxu0 0.0
    %135 = vmatpush1.xpose.msra.mxu0 %v68
    %136 = vmatprep.subr.mxu0 0.0
    %137 = vmatpush1.xpose.msra.mxu0 %v69
    %138 = vmatprep.subr.mxu0 0.0
    %139 = vmatpush1.xpose.msra.mxu0 %v70
    %140 = vmatprep.subr.mxu0 0.0
    %141 = vmatpush1.xpose.msra.mxu0 %v71
    %142 = vmatprep.subr.mxu0 0.0
    %143 = vmatpush1.xpose.msra.mxu0 %v72
    %144 = vmatprep.subr.mxu0 0.0
    %145 = vmatpush1.xpose.msra.mxu0 %v73
    %146 = vmatprep.subr.mxu0 0.0
    %147 = vmatpush1.xpose.msra.mxu0 %v74
    %148 = vmatprep.subr.mxu0 0.0
    %149 = vmatpush1.xpose.msra.mxu0 0.0
    %150 = vmatprep.subr.mxu0 0.0
    %151 = vmatpush1.xpose.msra.mxu0 0.0
    %152 = vmatprep.subr.mxu0 0.0
    %153 = vmatpush1.xpose.msra.mxu0 0.0
    %154 = vmatprep.subr.mxu0 0.0
    %155 = vmatpush1.xpose.msra.mxu0 0.0
    %156 = vmatprep.subr.mxu0 0.0
    %157 = vmatpush1.xpose.msra.mxu0 0.0
    %158 = vmatprep.subr.mxu0 0.0
    %159 = vmatpush1.xpose.msra.mxu0 0.0
    %160 = vmatprep.subr.mxu0 0.0
    %161 = vmatpush1.xpose.msra.mxu0 0.0
    %162 = vmatprep.subr.mxu0 0.0
    %163 = vmatpush1.xpose.msra.mxu0 0.0
    %164 = vmatprep.subr.mxu0 0.0
    %165 = vmatpush1.xpose.msra.mxu0 0.0
    %166 = vmatprep.subr.mxu0 0.0
    %167 = vmatpush1.xpose.msra.mxu0 0.0
    %168 = vmatprep.subr.mxu0 0.0
    %169 = vmatpush1.xpose.msra.mxu0 0.0
    %170 = vmatprep.subr.mxu0 0.0
    %171 = vmatpush1.xpose.msra.mxu0 0.0
    %172 = vmatprep.subr.mxu0 0.0
    %173 = vmatpush1.xpose.msra.mxu0 0.0
    %174 = vmatprep.subr.mxu0 0.0
    %175 = vmatpush1.xpose.msra.mxu0 0.0
    %176 = vmatprep.subr.mxu0 0.0
    %177 = vmatpush1.xpose.msra.mxu0 0.0
    %178 = vmatprep.subr.mxu0 0.0
    %179 = vmatpush1.xpose.msra.mxu0 0.0
    %180 = vmatprep.mubr.f32.mxu0 0.0
    %181 = vmatmul.mubr.f32.gmra.mrb[0].mxu0 %v76
    %v182 = vpop.f32.mrb[0].mxu0
    %v183 = vadd.f32 %v114, %v182
    %v184 = vpop.f32.mrb[0].mxu0
    %185 = vmatprep.mubr.f32.mxu0 0.0
    %186 = vmatmul.mubr.f32.gmra.mrb[0].mxu0 %v77
    %v187 = vpop.f32.mrb[0].mxu0
    %v188 = vadd.f32 %v114, %v187
    %v189 = vpop.f32.mrb[0].mxu0
    %190 = vdwg.mxu0
    %v191 = vmax.f32 %v183, 0.0
    %v192 = vmax.f32 %v188, 0.0
    %193 = vmatprep.subr.mxu0 0.0
    %194 = vmatpush1.xpose.msra.mxu0 %v59
    %195 = vmatprep.subr.mxu0 0.0
    %196 = vmatpush1.xpose.msra.mxu0 %v60
    %197 = vmatprep.subr.mxu0 0.0
    %198 = vmatpush1.xpose.msra.mxu0 %v61
    %199 = vmatprep.subr.mxu0 0.0
    %200 = vmatpush1.xpose.msra.mxu0 %v62
    %201 = vmatprep.subr.mxu0 0.0
    %202 = vmatpush1.xpose.msra.mxu0 %v63
    %203 = vmatprep.subr.mxu0 0.0
    %204 = vmatpush1.xpose.msra.mxu0 %v64
    %205 = vmatprep.subr.mxu0 0.0
    %206 = vmatpush1.xpose.msra.mxu0 %v65
    %207 = vmatprep.subr.mxu0 0.0
    %208 = vmatpush1.xpose.msra.mxu0 %v66
    %209 = vmatprep.subr.mxu0 0.0
    %210 = vmatpush1.xpose.msra.mxu0 %v67
    %211 = vmatprep.subr.mxu0 0.0
    %212 = vmatpush1.xpose.msra.mxu0 %v68
    %213 = vmatprep.subr.mxu0 0.0
    %214 = vmatpush1.xpose.msra.mxu0 %v69
    %215 = vmatprep.subr.mxu0 0.0
    %216 = vmatpush1.xpose.msra.mxu0 %v70
    %217 = vmatprep.subr.mxu0 0.0
    %218 = vmatpush1.xpose.msra.mxu0 %v71
    %219 = vmatprep.subr.mxu0 0.0
    %220 = vmatpush1.xpose.msra.mxu0 %v72
    %221 = vmatprep.subr.mxu0 0.0
    %222 = vmatpush1.xpose.msra.mxu0 %v73
    %223 = vmatprep.subr.mxu0 0.0
    %224 = vmatpush1.xpose.msra.mxu0 %v74
    %225 = vmatprep.subr.mxu0 0.0
    %226 = vmatpush1.xpose.msra.mxu0 0.0
    %227 = vmatprep.subr.mxu0 0.0
    %228 = vmatpush1.xpose.msra.mxu0 0.0
    %229 = vmatprep.subr.mxu0 0.0
    %230 = vmatpush1.xpose.msra.mxu0 0.0
    %231 = vmatprep.subr.mxu0 0.0
    %232 = vmatpush1.xpose.msra.mxu0 0.0
    %233 = vmatprep.subr.mxu0 0.0
    %234 = vmatpush1.xpose.msra.mxu0 0.0
    %235 = vmatprep.subr.mxu0 0.0
    %236 = vmatpush1.xpose.msra.mxu0 0.0
    %237 = vmatprep.subr.mxu0 0.0
    %238 = vmatpush1.xpose.msra.mxu0 0.0
    %239 = vmatprep.subr.mxu0 0.0
    %240 = vmatpush1.xpose.msra.mxu0 0.0
    %241 = vmatprep.subr.mxu0 0.0
    %242 = vmatpush1.xpose.msra.mxu0 0.0
    %243 = vmatprep.subr.mxu0 0.0
    %244 = vmatpush1.xpose.msra.mxu0 0.0
    %245 = vmatprep.subr.mxu0 0.0
    %246 = vmatpush1.xpose.msra.mxu0 0.0
    %247 = vmatprep.subr.mxu0 0.0
    %248 = vmatpush1.xpose.msra.mxu0 0.0
    %249 = vmatprep.subr.mxu0 0.0
    %250 = vmatpush1.xpose.msra.mxu0 0.0
    %251 = vmatprep.subr.mxu0 0.0
    %252 = vmatpush1.xpose.msra.mxu0 0.0
    %253 = vmatprep.subr.mxu0 0.0
    %254 = vmatpush1.xpose.msra.mxu0 0.0
    %255 = vmatprep.subr.mxu0 0.0
    %256 = vmatpush1.xpose.msra.mxu0 0.0
    %257 = vmatprep.mubr.f32.mxu0 0.0
    %258 = vmatmul.mubr.f32.gmra.mrb[0].mxu0 %v78
    %v259 = vpop.f32.mrb[0].mxu0
    %v260 = vadd.f32 %v114, %v259
    %v261 = vpop.f32.mrb[0].mxu0
    %262 = vmatprep.mubr.f32.mxu0 0.0
    %263 = vmatmul.mubr.f32.gmra.mrb[0].mxu0 %v79
    %v264 = vpop.f32.mrb[0].mxu0
    %v265 = vadd.f32 %v114, %v264
    %v266 = vpop.f32.mrb[0].mxu0
    %267 = vmatprep.mubr.f32.mxu0 0.0
    %268 = vmatmul.mubr.f32.gmra.mrb[0].mxu0 %v80
    %v269 = vpop.f32.mrb[0].mxu0
    %v270 = vadd.f32 %v114, %v269
    %v271 = vpop.f32.mrb[0].mxu0
    %272 = vmatprep.mubr.f32.mxu0 0.0
    %273 = vmatmul.mubr.f32.gmra.mrb[0].mxu0 %v81
    %v274 = vpop.f32.mrb[0].mxu0
    %v275 = vadd.f32 %v114, %v274
    %v276 = vpop.f32.mrb[0].mxu0
    %277 = vmatprep.mubr.f32.mxu0 0.0
    %278 = vmatmul.mubr.f32.gmra.mrb[0].mxu0 %v82
    %v279 = vpop.f32.mrb[0].mxu0
    %v280 = vadd.f32 %v114, %v279
    %v281 = vpop.f32.mrb[0].mxu0
    %282 = vmatprep.mubr.f32.mxu0 0.0
    %283 = vmatmul.mubr.f32.gmra.mrb[0].mxu0 %v83
    %v284 = vpop.f32.mrb[0].mxu0
    %v285 = vadd.f32 %v114, %v284
    %v286 = vpop.f32.mrb[0].mxu0
    %287 = vmatprep.mubr.f32.mxu0 0.0
    %288 = vmatmul.mubr.f32.gmra.mrb[0].mxu0 %v84
    %v289 = vpop.f32.mrb[0].mxu0
    %v290 = vadd.f32 %v114, %v289
    %v291 = vpop.f32.mrb[0].mxu0
    %292 = vmatprep.mubr.f32.mxu0 0.0
    %293 = vmatmul.mubr.f32.gmra.mrb[0].mxu0 %v85
    %v294 = vpop.f32.mrb[0].mxu0
    %v295 = vadd.f32 %v114, %v294
    %v296 = vpop.f32.mrb[0].mxu0
    %297 = vmatprep.mubr.f32.mxu0 0.0
    %298 = vmatmul.mubr.f32.gmra.mrb[0].mxu0 %v86
    %v299 = vpop.f32.mrb[0].mxu0
    %v300 = vadd.f32 %v114, %v299
    %v301 = vpop.f32.mrb[0].mxu0
    %302 = vmatprep.mubr.f32.mxu0 0.0
    %303 = vmatmul.mubr.f32.gmra.mrb[0].mxu0 %v87
    %v304 = vpop.f32.mrb[0].mxu0
    %v305 = vadd.f32 %v114, %v304
    %v306 = vpop.f32.mrb[0].mxu0
    %307 = vmatprep.mubr.f32.mxu0 0.0
    %308 = vmatmul.mubr.f32.gmra.mrb[0].mxu0 %v88
    %v309 = vpop.f32.mrb[0].mxu0
    %v310 = vadd.f32 %v114, %v309
    %v311 = vpop.f32.mrb[0].mxu0
    %312 = vmatprep.mubr.f32.mxu0 0.0
    %313 = vmatmul.mubr.f32.gmra.mrb[0].mxu0 %v89
    %v314 = vpop.f32.mrb[0].mxu0
    %v315 = vadd.f32 %v114, %v314
    %v316 = vpop.f32.mrb[0].mxu0
    %317 = vmatprep.mubr.f32.mxu0 0.0
    %318 = vmatmul.mubr.f32.gmra.mrb[0].mxu0 %v90
    %v319 = vpop.f32.mrb[0].mxu0
    %v320 = vadd.f32 %v114, %v319
    %v321 = vpop.f32.mrb[0].mxu0
    %322 = vmatprep.mubr.f32.mxu0 0.0
    %323 = vmatmul.mubr.f32.gmra.mrb[0].mxu0 %v91
    %v324 = vpop.f32.mrb[0].mxu0
    %v325 = vadd.f32 %v114, %v324
    %v326 = vpop.f32.mrb[0].mxu0
    %327 = vmatprep.mubr.f32.mxu0 0.0
    %328 = vmatmul.mubr.f32.gmra.mrb[0].mxu0 %v92
    %v329 = vpop.f32.mrb[0].mxu0
    %v330 = vadd.f32 %v114, %v329
    %v331 = vpop.f32.mrb[0].mxu0
    %332 = vmatprep.mubr.f32.mxu0 0.0
    %333 = vmatmul.mubr.f32.gmra.mrb[0].mxu0 %v93
    %v334 = vpop.f32.mrb[0].mxu0
    %v335 = vadd.f32 %v114, %v334
    %v336 = vpop.f32.mrb[0].mxu0
    %337 = vmatprep.mubr.f32.mxu0 0.0
    %338 = vmatmul.mubr.f32.gmra.mrb[0].mxu0 %v94
    %v339 = vpop.f32.mrb[0].mxu0
    %v340 = vadd.f32 %v114, %v339
    %v341 = vpop.f32.mrb[0].mxu0
    %342 = vmatprep.mubr.f32.mxu0 0.0
    %343 = vmatmul.mubr.f32.gmra.mrb[0].mxu0 %v95
    %v344 = vpop.f32.mrb[0].mxu0
    %v345 = vadd.f32 %v114, %v344
    %v346 = vpop.f32.mrb[0].mxu0
    %347 = vmatprep.mubr.f32.mxu0 0.0
    %348 = vmatmul.mubr.f32.gmra.mrb[0].mxu0 %v96
    %v349 = vpop.f32.mrb[0].mxu0
    %v350 = vadd.f32 %v114, %v349
    %v351 = vpop.f32.mrb[0].mxu0
    %352 = vmatprep.mubr.f32.mxu0 0.0
    %353 = vmatmul.mubr.f32.gmra.mrb[0].mxu0 %v97
    %v354 = vpop.f32.mrb[0].mxu0
    %v355 = vadd.f32 %v114, %v354
    %v356 = vpop.f32.mrb[0].mxu0
    %357 = vmatprep.mubr.f32.mxu0 0.0
    %358 = vmatmul.mubr.f32.gmra.mrb[0].mxu0 %v98
    %v359 = vpop.f32.mrb[0].mxu0
    %v360 = vadd.f32 %v114, %v359
    %v361 = vpop.f32.mrb[0].mxu0
    %362 = vmatprep.mubr.f32.mxu0 0.0
    %363 = vmatmul.mubr.f32.gmra.mrb[0].mxu0 %v99
    %v364 = vpop.f32.mrb[0].mxu0
    %v365 = vadd.f32 %v114, %v364
    %v366 = vpop.f32.mrb[0].mxu0
    %367 = vmatprep.mubr.f32.mxu0 0.0
    %368 = vmatmul.mubr.f32.gmra.mrb[0].mxu0 %v100
    %v369 = vpop.f32.mrb[0].mxu0
    %v370 = vadd.f32 %v114, %v369
    %v371 = vpop.f32.mrb[0].mxu0
    %372 = vmatprep.mubr.f32.mxu0 0.0
    %373 = vmatmul.mubr.f32.gmra.mrb[0].mxu0 %v101
    %v374 = vpop.f32.mrb[0].mxu0
    %v375 = vadd.f32 %v114, %v374
    %v376 = vpop.f32.mrb[0].mxu0
    %377 = vmatprep.mubr.f32.mxu0 0.0
    %378 = vmatmul.mubr.f32.gmra.mrb[0].mxu0 %v102
    %v379 = vpop.f32.mrb[0].mxu0
    %v380 = vadd.f32 %v114, %v379
    %v381 = vpop.f32.mrb[0].mxu0
    %382 = vmatprep.mubr.f32.mxu0 0.0
    %383 = vmatmul.mubr.f32.gmra.mrb[0].mxu0 %v103
    %v384 = vpop.f32.mrb[0].mxu0
    %v385 = vadd.f32 %v114, %v384
    %v386 = vpop.f32.mrb[0].mxu0
    %387 = vmatprep.mubr.f32.mxu0 0.0
    %388 = vmatmul.mubr.f32.gmra.mrb[0].mxu0 %v104
    %v389 = vpop.f32.mrb[0].mxu0
    %v390 = vadd.f32 %v114, %v389
    %v391 = vpop.f32.mrb[0].mxu0
    %392 = vmatprep.mubr.f32.mxu0 0.0
    %393 = vmatmul.mubr.f32.gmra.mrb[0].mxu0 %v105
    %v394 = vpop.f32.mrb[0].mxu0
    %v395 = vadd.f32 %v114, %v394
    %v396 = vpop.f32.mrb[0].mxu0
    %397 = vmatprep.mubr.f32.mxu0 0.0
    %398 = vmatmul.mubr.f32.gmra.mrb[0].mxu0 %v106
    %v399 = vpop.f32.mrb[0].mxu0
    %v400 = vadd.f32 %v114, %v399
    %v401 = vpop.f32.mrb[0].mxu0
    %402 = vmatprep.mubr.f32.mxu0 0.0
    %403 = vmatmul.mubr.f32.gmra.mrb[0].mxu0 %v107
    %v404 = vpop.f32.mrb[0].mxu0
    %v405 = vadd.f32 %v114, %v404
    %v406 = vpop.f32.mrb[0].mxu0
    %407 = vmatprep.mubr.f32.mxu0 0.0
    %408 = vmatmul.mubr.f32.gmra.mrb[0].mxu0 %v108
    %v409 = vpop.f32.mrb[0].mxu0
    %v410 = vadd.f32 %v114, %v409
    %v411 = vpop.f32.mrb[0].mxu0
    %412 = vmatprep.mubr.f32.mxu0 0.0
    %413 = vmatmul.mubr.f32.gmra.mrb[0].mxu0 %v109
    %v414 = vpop.f32.mrb[0].mxu0
    %v415 = vadd.f32 %v114, %v414
    %v416 = vpop.f32.mrb[0].mxu0
    %417 = vdwg.mxu0
    %v418 = vmax.f32 %v260, 0.0
    %v419 = vmax.f32 %v265, 0.0
    %v420 = vmax.f32 %v270, 0.0
    %v421 = vmax.f32 %v275, 0.0
    %v422 = vmax.f32 %v280, 0.0
    %v423 = vmax.f32 %v285, 0.0
    %v424 = vmax.f32 %v290, 0.0
    %v425 = vmax.f32 %v295, 0.0
    %v426 = vmax.f32 %v300, 0.0
    %v427 = vmax.f32 %v305, 0.0
    %v428 = vmax.f32 %v310, 0.0
    %v429 = vmax.f32 %v315, 0.0
    %v430 = vmax.f32 %v320, 0.0
    %v431 = vmax.f32 %v325, 0.0
    %v432 = vmax.f32 %v330, 0.0
    %v433 = vmax.f32 %v335, 0.0
    %v434 = vmax.f32 %v340, 0.0
    %v435 = vmax.f32 %v345, 0.0
    %v436 = vmax.f32 %v350, 0.0
    %v437 = vmax.f32 %v355, 0.0
    %v438 = vmax.f32 %v360, 0.0
    %v439 = vmax.f32 %v365, 0.0
    %v440 = vmax.f32 %v370, 0.0
    %v441 = vmax.f32 %v375, 0.0
    %v442 = vmax.f32 %v380, 0.0
    %v443 = vmax.f32 %v385, 0.0
    %v444 = vmax.f32 %v390, 0.0
    %v445 = vmax.f32 %v395, 0.0
    %v446 = vmax.f32 %v400, 0.0
    %v447 = vmax.f32 %v405, 0.0
    %v448 = vmax.f32 %v410, 0.0
    %v449 = vmax.f32 %v415, 0.0
    %450 = vmatprep.subr.mxu0 0.0
    %451 = vmatpush1.xpose.msra.mxu0 %v418
    %452 = vmatprep.subr.mxu0 0.0
    %453 = vmatpush1.xpose.msra.mxu0 %v419
    %454 = vmatprep.subr.mxu0 0.0
    %455 = vmatpush1.xpose.msra.mxu0 %v420
    %456 = vmatprep.subr.mxu0 0.0
    %457 = vmatpush1.xpose.msra.mxu0 %v421
    %458 = vmatprep.subr.mxu0 0.0
    %459 = vmatpush1.xpose.msra.mxu0 %v422
    %460 = vmatprep.subr.mxu0 0.0
    %461 = vmatpush1.xpose.msra.mxu0 %v423
    %462 = vmatprep.subr.mxu0 0.0
    %463 = vmatpush1.xpose.msra.mxu0 %v424
    %464 = vmatprep.subr.mxu0 0.0
    %465 = vmatpush1.xpose.msra.mxu0 %v425
    %466 = vmatprep.subr.mxu0 0.0
    %467 = vmatpush1.xpose.msra.mxu0 %v426
    %468 = vmatprep.subr.mxu0 0.0
    %469 = vmatpush1.xpose.msra.mxu0 %v427
    %470 = vmatprep.subr.mxu0 0.0
    %471 = vmatpush1.xpose.msra.mxu0 %v428
    %472 = vmatprep.subr.mxu0 0.0
    %473 = vmatpush1.xpose.msra.mxu0 %v429
    %474 = vmatprep.subr.mxu0 0.0
    %475 = vmatpush1.xpose.msra.mxu0 %v430
    %476 = vmatprep.subr.mxu0 0.0
    %477 = vmatpush1.xpose.msra.mxu0 %v431
    %478 = vmatprep.subr.mxu0 0.0
    %479 = vmatpush1.xpose.msra.mxu0 %v432
    %480 = vmatprep.subr.mxu0 0.0
    %481 = vmatpush1.xpose.msra.mxu0 %v433
    %482 = vmatprep.subr.mxu0 0.0
    %483 = vmatpush1.xpose.msra.mxu0 0.0
    %484 = vmatprep.subr.mxu0 0.0
    %485 = vmatpush1.xpose.msra.mxu0 0.0
    %486 = vmatprep.subr.mxu0 0.0
    %487 = vmatpush1.xpose.msra.mxu0 0.0
    %488 = vmatprep.subr.mxu0 0.0
    %489 = vmatpush1.xpose.msra.mxu0 0.0
    %490 = vmatprep.subr.mxu0 0.0
    %491 = vmatpush1.xpose.msra.mxu0 0.0
    %492 = vmatprep.subr.mxu0 0.0
    %493 = vmatpush1.xpose.msra.mxu0 0.0
    %494 = vmatprep.subr.mxu0 0.0
    %495 = vmatpush1.xpose.msra.mxu0 0.0
    %496 = vmatprep.subr.mxu0 0.0
    %497 = vmatpush1.xpose.msra.mxu0 0.0
    %498 = vmatprep.subr.mxu0 0.0
    %499 = vmatpush1.xpose.msra.mxu0 0.0
    %500 = vmatprep.subr.mxu0 0.0
    %501 = vmatpush1.xpose.msra.mxu0 0.0
    %502 = vmatprep.subr.mxu0 0.0
    %503 = vmatpush1.xpose.msra.mxu0 0.0
    %504 = vmatprep.subr.mxu0 0.0
    %505 = vmatpush1.xpose.msra.mxu0 0.0
    %506 = vmatprep.subr.mxu0 0.0
    %507 = vmatpush1.xpose.msra.mxu0 0.0
    %508 = vmatprep.subr.mxu0 0.0
    %509 = vmatpush1.xpose.msra.mxu0 0.0
    %510 = vmatprep.subr.mxu0 0.0
    %511 = vmatpush1.xpose.msra.mxu0 0.0
    %512 = vmatprep.subr.mxu0 0.0
    %513 = vmatpush1.xpose.msra.mxu0 0.0
    %514 = vmatprep.mubr.f32.mxu0 0.0
    %515 = vmatmul.mubr.f32.gmra.mrb[0].mxu0 %v191
    %v516 = vpop.f32.mrb[0].mxu0
    %v517 = vadd.f32 0.0, %v516
    %v518 = vpop.f32.mrb[0].mxu0
    %519 = vdwg.mxu0
    %520 = vmatprep.subr.mxu0 0.0
    %521 = vmatpush1.xpose.msra.mxu0 %v434
    %522 = vmatprep.subr.mxu0 0.0
    %523 = vmatpush1.xpose.msra.mxu0 %v435
    %524 = vmatprep.subr.mxu0 0.0
    %525 = vmatpush1.xpose.msra.mxu0 %v436
    %526 = vmatprep.subr.mxu0 0.0
    %527 = vmatpush1.xpose.msra.mxu0 %v437
    %528 = vmatprep.subr.mxu0 0.0
    %529 = vmatpush1.xpose.msra.mxu0 %v438
    %530 = vmatprep.subr.mxu0 0.0
    %531 = vmatpush1.xpose.msra.mxu0 %v439
    %532 = vmatprep.subr.mxu0 0.0
    %533 = vmatpush1.xpose.msra.mxu0 %v440
    %534 = vmatprep.subr.mxu0 0.0
    %535 = vmatpush1.xpose.msra.mxu0 %v441
    %536 = vmatprep.subr.mxu0 0.0
    %537 = vmatpush1.xpose.msra.mxu0 %v442
    %538 = vmatprep.subr.mxu0 0.0
    %539 = vmatpush1.xpose.msra.mxu0 %v443
    %540 = vmatprep.subr.mxu0 0.0
    %541 = vmatpush1.xpose.msra.mxu0 %v444
    %542 = vmatprep.subr.mxu0 0.0
    %543 = vmatpush1.xpose.msra.mxu0 %v445
    %544 = vmatprep.subr.mxu0 0.0
    %545 = vmatpush1.xpose.msra.mxu0 %v446
    %546 = vmatprep.subr.mxu0 0.0
    %547 = vmatpush1.xpose.msra.mxu0 %v447
    %548 = vmatprep.subr.mxu0 0.0
    %549 = vmatpush1.xpose.msra.mxu0 %v448
    %550 = vmatprep.subr.mxu0 0.0
    %551 = vmatpush1.xpose.msra.mxu0 %v449
    %552 = vmatprep.subr.mxu0 0.0
    %553 = vmatpush1.xpose.msra.mxu0 0.0
    %554 = vmatprep.subr.mxu0 0.0
    %555 = vmatpush1.xpose.msra.mxu0 0.0
    %556 = vmatprep.subr.mxu0 0.0
    %557 = vmatpush1.xpose.msra.mxu0 0.0
    %558 = vmatprep.subr.mxu0 0.0
    %559 = vmatpush1.xpose.msra.mxu0 0.0
    %560 = vmatprep.subr.mxu0 0.0
    %561 = vmatpush1.xpose.msra.mxu0 0.0
    %562 = vmatprep.subr.mxu0 0.0
    %563 = vmatpush1.xpose.msra.mxu0 0.0
    %564 = vmatprep.subr.mxu0 0.0
    %565 = vmatpush1.xpose.msra.mxu0 0.0
    %566 = vmatprep.subr.mxu0 0.0
    %567 = vmatpush1.xpose.msra.mxu0 0.0
    %568 = vmatprep.subr.mxu0 0.0
    %569 = vmatpush1.xpose.msra.mxu0 0.0
    %570 = vmatprep.subr.mxu0 0.0
    %571 = vmatpush1.xpose.msra.mxu0 0.0
    %572 = vmatprep.subr.mxu0 0.0
    %573 = vmatpush1.xpose.msra.mxu0 0.0
    %574 = vmatprep.subr.mxu0 0.0
    %575 = vmatpush1.xpose.msra.mxu0 0.0
    %576 = vmatprep.subr.mxu0 0.0
    %577 = vmatpush1.xpose.msra.mxu0 0.0
    %578 = vmatprep.subr.mxu0 0.0
    %579 = vmatpush1.xpose.msra.mxu0 0.0
    %580 = vmatprep.subr.mxu0 0.0
    %581 = vmatpush1.xpose.msra.mxu0 0.0
    %582 = vmatprep.subr.mxu0 0.0
    %583 = vmatpush1.xpose.msra.mxu0 0.0
    %584 = vmatprep.mubr.f32.mxu0 0.0
    %585 = vmatmul.mubr.f32.gmra.mrb[0].mxu0 %v192
    %v586 = vpop.f32.mrb[0].mxu0
    %v587 = vadd.f32 0.0, %v586
    %v588 = vpop.f32.mrb[0].mxu0
    %589 = vdwg.mxu0
    %v590 = vlaneseq
    %v591 = vand.u32 %v590, 127
    %vm592 = vcmp.lt.s32.totalorder %v591, 8
    %v593 = vsel %vm592, 1, 0
    %vm594 = vcmp.eq.s32.totalorder %v593, 1
    %v595 = vsel %vm594, %v517, -1e+30
    %v596 = vsel %vm594, %v587, -1e+30
    %597 = vmax.xlane.f32.xlu0 %v595
    %v598 = vpop.xlane.xlu0 %597
    %599 = vmax.xlane.f32.xlu0 %v596
    %v600 = vpop.xlane.xlu0 %599
    %v601 = vrot.slane %v598, 4
    %v602 = vmax.f32 %v598, %v601
    %v603 = vrot.slane %v602, 2
    %v604 = vmax.f32 %v602, %v603
    %v605 = vrot.slane %v604, 1
    %v606 = vmax.f32 %v604, %v605
    %v607 = vrot.slane %v600, 4
    %v608 = vmax.f32 %v600, %v607
    %v609 = vrot.slane %v608, 2
    %v610 = vmax.f32 %v608, %v609
    %v611 = vrot.slane %v610, 1
    %v612 = vmax.f32 %v610, %v611
    %v613 = vsub.f32 %v595, %v606
    %v614 = vsub.f32 %v596, %v612
    %v615 = vmul.f32 %v613, 1.442695
    %v616 = vpow.pop %v615
    %v617 = vmul.f32 %v614, 1.442695
    %v618 = vpow.pop %v617
    %619 = vadd.xlane.f32.xlu0 %v616
    %v620 = vpop.xlane.xlu0 %619
    %621 = vadd.xlane.f32.xlu0 %v618
    %v622 = vpop.xlane.xlu0 %621
    %v623 = vrot.slane %v620, 4
    %v624 = vadd.f32 %v620, %v623
    %v625 = vrot.slane %v624, 2
    %v626 = vadd.f32 %v624, %v625
    %v627 = vrot.slane %v626, 1
    %v628 = vadd.f32 %v626, %v627
    %v629 = vrot.slane %v622, 4
    %v630 = vadd.f32 %v622, %v629
    %v631 = vrot.slane %v630, 2
    %v632 = vadd.f32 %v630, %v631
    %v633 = vrot.slane %v632, 1
    %v634 = vadd.f32 %v632, %v633
    %v635 = vld [vmem:[#allocation5] sm:$0xff]
    %v636 = vld [vmem:[#allocation5 + $0x8] sm:$0xff]
    %v637 = vld [vmem:[#allocation5 + $0x10] sm:$0xff]
    %v638 = vld [vmem:[#allocation5 + $0x18] sm:$0xff]
    %v639 = vld [vmem:[#allocation5 + $0x20] sm:$0xff]
    %v640 = vld [vmem:[#allocation5 + $0x28] sm:$0xff]
    %v641 = vld [vmem:[#allocation5 + $0x30] sm:$0xff]
    %v642 = vld [vmem:[#allocation5 + $0x38] sm:$0xff]
    %v643 = vld [vmem:[#allocation5 + $0x40] sm:$0xff]
    %v644 = vld [vmem:[#allocation5 + $0x48] sm:$0xff]
    %v645 = vld [vmem:[#allocation5 + $0x50] sm:$0xff]
    %v646 = vld [vmem:[#allocation5 + $0x58] sm:$0xff]
    %v647 = vld [vmem:[#allocation5 + $0x60] sm:$0xff]
    %v648 = vld [vmem:[#allocation5 + $0x68] sm:$0xff]
    %v649 = vld [vmem:[#allocation5 + $0x70] sm:$0xff]
    %v650 = vld [vmem:[#allocation5 + $0x78] sm:$0xff]
    %v651 = vld [vmem:[#allocation5 + $0x80] sm:$0xff]
    %v652 = vld [vmem:[#allocation5 + $0x88] sm:$0xff]
    %v653 = vld [vmem:[#allocation5 + $0x90] sm:$0xff]
    %v654 = vld [vmem:[#allocation5 + $0x98] sm:$0xff]
    %v655 = vld [vmem:[#allocation5 + $0xa0] sm:$0xff]
    %v656 = vld [vmem:[#allocation5 + $0xa8] sm:$0xff]
    %v657 = vld [vmem:[#allocation5 + $0xb0] sm:$0xff]
    %v658 = vld [vmem:[#allocation5 + $0xb8] sm:$0xff]
    %v659 = vld [vmem:[#allocation5 + $0xc0] sm:$0xff]
    %v660 = vld [vmem:[#allocation5 + $0xc8] sm:$0xff]
    %v661 = vld [vmem:[#allocation5 + $0xd0] sm:$0xff]
    %v662 = vld [vmem:[#allocation5 + $0xd8] sm:$0xff]
    %v663 = vld [vmem:[#allocation5 + $0xe0] sm:$0xff]
    %v664 = vld [vmem:[#allocation5 + $0xe8] sm:$0xff]
    %v665 = vld [vmem:[#allocation5 + $0xf0] sm:$0xff]
    %v666 = vld [vmem:[#allocation5 + $0xf8] sm:$0xff]
    %667 = vmatprep.subr.mxu0 0.0
    %668 = vmatpush1.msra.mxu0 %v635
    %669 = vmatprep.subr.mxu0 0.0
    %670 = vmatpush1.msra.mxu0 %v636
    %671 = vmatprep.subr.mxu0 0.0
    %672 = vmatpush1.msra.mxu0 %v637
    %673 = vmatprep.subr.mxu0 0.0
    %674 = vmatpush1.msra.mxu0 %v638
    %675 = vmatprep.subr.mxu0 0.0
    %676 = vmatpush1.msra.mxu0 %v639
    %677 = vmatprep.subr.mxu0 0.0
    %678 = vmatpush1.msra.mxu0 %v640
    %679 = vmatprep.subr.mxu0 0.0
    %680 = vmatpush1.msra.mxu0 %v641
    %681 = vmatprep.subr.mxu0 0.0
    %682 = vmatpush1.msra.mxu0 %v642
    %683 = vmatprep.subr.mxu0 0.0
    %684 = vmatpush1.msra.mxu0 %v643
    %685 = vmatprep.subr.mxu0 0.0
    %686 = vmatpush1.msra.mxu0 %v644
    %687 = vmatprep.subr.mxu0 0.0
    %688 = vmatpush1.msra.mxu0 %v645
    %689 = vmatprep.subr.mxu0 0.0
    %690 = vmatpush1.msra.mxu0 %v646
    %691 = vmatprep.subr.mxu0 0.0
    %692 = vmatpush1.msra.mxu0 %v647
    %693 = vmatprep.subr.mxu0 0.0
    %694 = vmatpush1.msra.mxu0 %v648
    %695 = vmatprep.subr.mxu0 0.0
    %696 = vmatpush1.msra.mxu0 %v649
    %697 = vmatprep.subr.mxu0 0.0
    %698 = vmatpush1.msra.mxu0 %v650
    %699 = vmatprep.subr.mxu0 0.0
    %700 = vmatpush1.msra.mxu0 0.0
    %701 = vmatprep.subr.mxu0 0.0
    %702 = vmatpush1.msra.mxu0 0.0
    %703 = vmatprep.subr.mxu0 0.0
    %704 = vmatpush1.msra.mxu0 0.0
    %705 = vmatprep.subr.mxu0 0.0
    %706 = vmatpush1.msra.mxu0 0.0
    %707 = vmatprep.subr.mxu0 0.0
    %708 = vmatpush1.msra.mxu0 0.0
    %709 = vmatprep.subr.mxu0 0.0
    %710 = vmatpush1.msra.mxu0 0.0
    %711 = vmatprep.subr.mxu0 0.0
    %712 = vmatpush1.msra.mxu0 0.0
    %713 = vmatprep.subr.mxu0 0.0
    %714 = vmatpush1.msra.mxu0 0.0
    %715 = vmatprep.subr.mxu0 0.0
    %716 = vmatpush1.msra.mxu0 0.0
    %717 = vmatprep.subr.mxu0 0.0
    %718 = vmatpush1.msra.mxu0 0.0
    %719 = vmatprep.subr.mxu0 0.0
    %720 = vmatpush1.msra.mxu0 0.0
    %721 = vmatprep.subr.mxu0 0.0
    %722 = vmatpush1.msra.mxu0 0.0
    %723 = vmatprep.subr.mxu0 0.0
    %724 = vmatpush1.msra.mxu0 0.0
    %725 = vmatprep.subr.mxu0 0.0
    %726 = vmatpush1.msra.mxu0 0.0
    %727 = vmatprep.subr.mxu0 0.0
    %728 = vmatpush1.msra.mxu0 0.0
    %729 = vmatprep.subr.mxu0 0.0
    %730 = vmatpush1.msra.mxu0 0.0
    %731 = vmatprep.mubr.f32.mxu0 0.0
    %732 = vmatmul.mubr.f32.gmra.mrb[0].mxu0 %v616
    %v733 = vpop.f32.mrb[0].mxu0
    %v734 = vadd.f32 0.0, %v733
    %v735 = vpop.f32.mrb[0].mxu0
    %736 = vdwg.mxu0
    %737 = vmatprep.subr.mxu0 0.0
    %738 = vmatpush1.msra.mxu0 %v651
    %739 = vmatprep.subr.mxu0 0.0
    %740 = vmatpush1.msra.mxu0 %v652
    %741 = vmatprep.subr.mxu0 0.0
    %742 = vmatpush1.msra.mxu0 %v653
    %743 = vmatprep.subr.mxu0 0.0
    %744 = vmatpush1.msra.mxu0 %v654
    %745 = vmatprep.subr.mxu0 0.0
    %746 = vmatpush1.msra.mxu0 %v655
    %747 = vmatprep.subr.mxu0 0.0
    %748 = vmatpush1.msra.mxu0 %v656
    %749 = vmatprep.subr.mxu0 0.0
    %750 = vmatpush1.msra.mxu0 %v657
    %751 = vmatprep.subr.mxu0 0.0
    %752 = vmatpush1.msra.mxu0 %v658
    %753 = vmatprep.subr.mxu0 0.0
    %754 = vmatpush1.msra.mxu0 %v659
    %755 = vmatprep.subr.mxu0 0.0
    %756 = vmatpush1.msra.mxu0 %v660
    %757 = vmatprep.subr.mxu0 0.0
    %758 = vmatpush1.msra.mxu0 %v661
    %759 = vmatprep.subr.mxu0 0.0
    %760 = vmatpush1.msra.mxu0 %v662
    %761 = vmatprep.subr.mxu0 0.0
    %762 = vmatpush1.msra.mxu0 %v663
    %763 = vmatprep.subr.mxu0 0.0
    %764 = vmatpush1.msra.mxu0 %v664
    %765 = vmatprep.subr.mxu0 0.0
    %766 = vmatpush1.msra.mxu0 %v665
    %767 = vmatprep.subr.mxu0 0.0
    %768 = vmatpush1.msra.mxu0 %v666
    %769 = vmatprep.subr.mxu0 0.0
    %770 = vmatpush1.msra.mxu0 0.0
    %771 = vmatprep.subr.mxu0 0.0
    %772 = vmatpush1.msra.mxu0 0.0
    %773 = vmatprep.subr.mxu0 0.0
    %774 = vmatpush1.msra.mxu0 0.0
    %775 = vmatprep.subr.mxu0 0.0
    %776 = vmatpush1.msra.mxu0 0.0
    %777 = vmatprep.subr.mxu0 0.0
    %778 = vmatpush1.msra.mxu0 0.0
    %779 = vmatprep.subr.mxu0 0.0
    %780 = vmatpush1.msra.mxu0 0.0
    %781 = vmatprep.subr.mxu0 0.0
    %782 = vmatpush1.msra.mxu0 0.0
    %783 = vmatprep.subr.mxu0 0.0
    %784 = vmatpush1.msra.mxu0 0.0
    %785 = vmatprep.subr.mxu0 0.0
    %786 = vmatpush1.msra.mxu0 0.0
    %787 = vmatprep.subr.mxu0 0.0
    %788 = vmatpush1.msra.mxu0 0.0
    %789 = vmatprep.subr.mxu0 0.0
    %790 = vmatpush1.msra.mxu0 0.0
    %791 = vmatprep.subr.mxu0 0.0
    %792 = vmatpush1.msra.mxu0 0.0
    %793 = vmatprep.subr.mxu0 0.0
    %794 = vmatpush1.msra.mxu0 0.0
    %795 = vmatprep.subr.mxu0 0.0
    %796 = vmatpush1.msra.mxu0 0.0
    %797 = vmatprep.subr.mxu0 0.0
    %798 = vmatpush1.msra.mxu0 0.0
    %799 = vmatprep.subr.mxu0 0.0
    %800 = vmatpush1.msra.mxu0 0.0
    %801 = vmatprep.mubr.f32.mxu0 0.0
    %802 = vmatmul.mubr.f32.gmra.mrb[0].mxu0 %v618
    %v803 = vpop.f32.mrb[0].mxu0
    %v804 = vadd.f32 0.0, %v803
    %v805 = vpop.f32.mrb[0].mxu0
    %806 = vdwg.mxu0
    %v807 = vrcp.pop %v628
    %v808 = vmul.f32 %v734, %v807
    %v809 = vrcp.pop %v634
    %v810 = vmul.f32 %v804, %v809
    %811 = vst [vmem:[#allocation8] sm:$0xff] %v808
    %812 = vst [vmem:[#allocation8 + $0x8] sm:$0xff] %v810
    // Predicated region
    $region30: #{tpu_custom_call.1} parent=1 // pred_check
      _
    $region31: #{tpu_custom_call.1} parent=1 // pred_check_branch
      %814 = sbr.rel (0) target = $region33
    $region32: #{tpu_custom_call.1} parent=1 // pred_region
      %s816 = ssub.s32 256, 256
      %817 = vsyncadd [#allocation4], %s816
      %s818 = sshll.u32 [#allocation8], 4
      %s819 = int_to_ptr.vmem [resolvable:$true] %s818
      %824 = dma.vmem_to_hbm [thread:$0]  %s819, 256, %s4, [#allocation4], 128, 128, 8
    $region33: #{tpu_custom_call.1} parent=1 // pred_fallthru
      _
    // Predicated region
    $region34: #{tpu_custom_call.1} parent=1 // pred_check
      _
    $region35: #{tpu_custom_call.1} parent=1 // pred_check_branch
      %826 = sbr.rel (0) target = $region37
    $region36: #{tpu_custom_call.1} parent=1 // pred_region
      %827 = dma.done [#allocation4], 256
    $region37: #{tpu_custom_call.1} parent=1 // pred_fallthru
      _
    %828 = vsyncpa [#allocation3], 1
    %829 = vsyncpa [#allocation6], 1
    %830 = vsyncpa [#allocation4], 1

</llo_original>
